<compile_context>
chip_gen: v5e
topology: v5e:2x2
jax: 0.10.0
libtpu: 0.0.40
codegen_flags: <defaults>
</compile_context>

<pallas_src>
import math

import jax
import jax.numpy as jnp
from jax import lax
from jax.experimental import pallas as pl
from jax.experimental.pallas import tpu as pltpu
from jax.scipy.special import gammaln

# ---------------- model config (small, consistent with the module) -----------
BATCH = 8
N_INPUT_PROTEINS = 16
N_OUTPUT_PROTEINS = 16
SHARED_FEATURES = list(range(N_OUTPUT_PROTEINS))   # identity -> y[:, shared] == y
N_HIDDEN = 32
N_LATENT = 8
# n_batch = 0, n_labels = 0, protein_dispersion='protein',
# log_variational=True, latent_distribution='ln', protein_batch_mask=None

TILE_B = 8
LANE = 128
N_W_BLOCKS = 7
C_ROWS = 16
EPS = 1e-8

# c_slab row indices
_R_B0, _R_B1M, _R_B1V, _R_B2, _R_B3, _R_B4 = 0, 1, 2, 3, 4, 5
_R_THETA, _R_LOG_THETA, _R_LGAMMA_THETA = 6, 7, 8
_R_ALPHA_PR, _R_RECIP_BETA_PR, _R_LOG_BETA_PR = 9, 10, 11

_HALF_LOG_2PI = 0.5 * math.log(2.0 * math.pi)


def _lgamma_pos(z):
    """log Gamma(z) for z > 0: shift-by-2 recurrence + Stirling series.

    One approx reciprocal + two logs instead of the 8 serial divides of the
    previous Lanczos form; abs error ~1e-5 for all z > 0 (handles theta < 0.5).
    """
    w = z + 2.0
    rw = pl.reciprocal(w, approx=True)
    corr = rw * (1.0 / 12.0 - (rw * rw) * (1.0 / 360.0))
    stirling = (w - 0.5) * jnp.log(w) - w + _HALF_LOG_2PI + corr
    return stirling - jnp.log(z * (z + 1.0))


# ------------------------------- Pallas kernel --------------------------------
def proteinvi_kernel(d_ref, w_ref, c_ref, out_ref):
    P, H, L = N_OUTPUT_PROTEINS, N_HIDDEN, N_LATENT
    tb = d_ref.shape[0]

    d = d_ref[...]                                    # (TB, 384) f32
    x_full = d[:, 0:LANE]                             # counts at lanes 0:P, 0 elsewhere
    eps_z_full = d[:, LANE:2 * LANE]                  # eps_z at lanes 0:L
    eps_b_full = d[:, 2 * LANE:3 * LANE]              # eps_b at lanes 0:P

    c = c_ref[...]                                    # (16, 128) f32

    def bias(r):
        return c[r:r + 1, :]                          # (1, 128), zero-padded

    def mm(a, blk):                                   # (TB,128) @ 128x128 bf16 -> f32
        return jnp.dot(a.astype(jnp.bfloat16),
                       w_ref[blk * LANE:(blk + 1) * LANE, :],
                       preferred_element_type=jnp.float32)

    lane = lax.broadcasted_iota(jnp.int32, (tb, LANE), 1)

    # -------- encoder: q(z | log1p(y)), latent_distribution == 'ln' ----------
    h1 = jnp.maximum(mm(jnp.log(1.0 + x_full), 0) + bias(_R_B0), 0.0)
    qz_m = mm(h1, 1) + bias(_R_B1M)                   # real at lanes 0:L
    qz_v = jnp.exp(mm(h1, 2) + bias(_R_B1V)) + 1e-4
    untran_z = qz_m + jnp.sqrt(qz_v) * eps_z_full     # rsample
    um = jnp.where(lane < L, untran_z, -1e30)         # masked softmax over 0:L
    um_max = jnp.max(um, axis=-1, keepdims=True)
    ez = jnp.exp(um - um_max)
    z = ez / jnp.sum(ez, axis=-1, keepdims=True)      # exactly 0 outside lanes 0:L

    # -------- decoder: 4 protein heads fused into 4 MXU pushes ---------------
    hbfm = jnp.maximum(mm(z, 3) + bias(_R_B2), 0.0)            # [hb | hf | hm]
    h2 = jnp.maximum(mm(hbfm, 4) + mm(z, 5) + bias(_R_B3), 0.0)  # [ha|hbt|hfs|hmx]
    dec3 = mm(h2, 6) + bias(_R_B4)    # [back_alpha | log_back_beta | fore | mixing]

    back_alpha = dec3[:, 0 * P:1 * P]
    bt_logit = dec3[:, 1 * P:2 * P]                   # log(back_beta)
    fore_pre = dec3[:, 2 * P:3 * P]
    mixing = dec3[:, 3 * P:4 * P]

    x = x_full[:, 0:P]                                # y[:, shared] (identity set)
    eps_b = eps_b_full[:, 0:P]
    theta = c[_R_THETA:_R_THETA + 1, 0:P]
    log_theta = c[_R_LOG_THETA:_R_LOG_THETA + 1, 0:P]
    lg_theta = c[_R_LGAMMA_THETA:_R_LGAMMA_THETA + 1, 0:P]
    alpha_pr = c[_R_ALPHA_PR:_R_ALPHA_PR + 1, 0:P]
    r_beta = c[_R_RECIP_BETA_PR:_R_RECIP_BETA_PR + 1, 0:P]
    log_beta = c[_R_LOG_BETA_PR:_R_LOG_BETA_PR + 1, 0:P]

    back_beta = jnp.exp(bt_logit)
    rate_back = jnp.exp(back_alpha + back_beta * eps_b)        # rsample + exp
    rate_fore = rate_back * (jnp.maximum(fore_pre, 0.0) + 1.0 + EPS)

    # -------- reconstruction loss: -log_mixture_nb, summed over proteins -----
    log_tm1 = jnp.log(theta + rate_back + EPS)
    log_tm2 = jnp.log(theta + rate_fore + EPS)
    lg_shared = _lgamma_pos(x + theta) - lg_theta - _lgamma_pos(x + 1.0)
    log_nb1 = (theta * (log_theta - log_tm1)
               + x * (jnp.log(rate_back + EPS) - log_tm1) + lg_shared)
    log_nb2 = (theta * (log_theta - log_tm2)
               + x * (jnp.log(rate_fore + EPS) - log_tm2) + lg_shared)
    a1 = log_nb1
    a2 = log_nb2 - mixing
    lse = jnp.maximum(a1, a2) + jnp.log(1.0 + jnp.exp(-jnp.abs(a1 - a2)))
    sp_neg_mix = (jnp.maximum(-mixing, 0.0)
                  + jnp.log(1.0 + jnp.exp(-jnp.abs(mixing))))
    rec = jnp.sum(sp_neg_mix - lse, axis=-1, keepdims=True)    # sum(-log_mix_nb)

    # -------- KL(q(z) || N(0,1)).sum(dim=1) ----------------------------------
    qm = qz_m[:, 0:L]
    qv = qz_v[:, 0:L]
    klz = jnp.sum(0.5 * (qv + qm * qm - 1.0 - jnp.log(qv)),
                  axis=-1, keepdims=True)

    # ---- KL(N(back_alpha, back_beta) || N(alpha_prior, beta_prior)) ---------
    ratio = back_beta * r_beta
    dmean = (back_alpha - alpha_pr) * r_beta
    klb = jnp.sum(0.5 * (ratio * ratio + dmean * dmean - 1.0)
                  - (bt_logit - log_beta), axis=-1, keepdims=True)

    # -------- single lane-dense output slab: [z | rec | klz | klb | 0...] ----
    out = z                                            # zeros outside lanes 0:L
    out = out + jnp.where(lane == L, rec, 0.0)
    out = out + jnp.where(lane == L + 1, klz, 0.0)
    out = out + jnp.where(lane == L + 2, klb, 0.0)
    out_ref[...] = out


# ------------------------------ params & packing -------------------------------
def _linear_init(key, fan_in, fan_out):
    kw, kb = jax.random.split(key)
    bound = 1.0 / math.sqrt(fan_in)
    w = jax.random.uniform(kw, (fan_in, fan_out), jnp.float32, -bound, bound)
    b = jax.random.uniform(kb, (1, fan_out), jnp.float32, -bound, bound)
    return w, b


def init_params(key):
    P_in, P_out, H, L = N_INPUT_PROTEINS, N_OUTPUT_PROTEINS, N_HIDDEN, N_LATENT
    keys = iter(jax.random.split(key, 16))
    p = {}
    p["We1"], p["be1"] = _linear_init(next(keys), P_in, H)
    p["Wzm"], p["bzm"] = _linear_init(next(keys), H, L)
    p["Wzv"], p["bzv"] = _linear_init(next(keys), H, L)
    p["Wb1"], p["bb1"] = _linear_init(next(keys), L, H)

    def head(k):  # FCLayers(H+L -> H) + Linear(H -> P_out), W1 split into (h, z)
        k1, k2 = jax.random.split(k)
        w1, b1 = _linear_init(k1, H + L, H)
        w2, b2 = _linear_init(k2, H, P_out)
        return w1[:H, :], w1[H:, :], b1, w2, b2

    (p["Wa1h"], p["Wa1z"], p["ba1"], p["Wa2"], p["ba2"]) = head(next(keys))
    (p["Wbt1h"], p["Wbt1z"], p["bbt1"], p["Wbt2"], p["bbt2"]) = head(next(keys))
    p["Wf1"], p["bf1"] = _linear_init(next(keys), L, H)
    (p["Wfs1h"], p["Wfs1z"], p["bfs1"], p["Wfs2"], p["bfs2"]) = head(next(keys))
    p["Wm1"], p["bm1"] = _linear_init(next(keys), L, H)
    (p["Wmx1h"], p["Wmx1z"], p["bmx1"], p["Wmx2"], p["bmx2"]) = head(next(keys))

    ka, kb = jax.random.split(next(keys))
    p["alpha_prior"] = jax.random.normal(ka, (1, P_out), jnp.float32)
    p["log_beta_prior"] = jnp.clip(
        jax.random.normal(kb, (1, P_out), jnp.float32), -10.0, 1.0)
    p["py_r"] = jnp.ones((1, P_out), jnp.float32)
    return p


def pack_params(p):
    """Pack all params into a bf16 weight slab and an f32 bias/constant slab."""
    P, H, L = N_OUTPUT_PROTEINS, N_HIDDEN, N_LATENT
    w = jnp.zeros((N_W_BLOCKS * LANE, LANE), jnp.float32)

    def put(wacc, blk, r0, c0, mat):
        return wacc.at[blk * LANE + r0: blk * LANE + r0 + mat.shape[0],
                       c0: c0 + mat.shape[1]].set(mat)

    # block 0: encoder layer 1
    w = put(w, 0, 0, 0, p["We1"])
    # blocks 1/2: latent mean / log-var heads
    w = put(w, 1, 0, 0, p["Wzm"])
    w = put(w, 2, 0, 0, p["Wzv"])
    # block 3: decoder layer-1, three heads fused along N: [Wb1 | Wf1 | Wm1]
    w = put(w, 3, 0, 0 * H, p["Wb1"])
    w = put(w, 3, 0, 1 * H, p["Wf1"])
    w = put(w, 3, 0, 2 * H, p["Wm1"])
    # block 4: decoder layer-2 hidden path, block-diagonal over [hb | hf | hm]
    w = put(w, 4, 0 * H, 0 * H, p["Wa1h"])
    w = put(w, 4, 0 * H, 1 * H, p["Wbt1h"])
    w = put(w, 4, 1 * H, 2 * H, p["Wfs1h"])
    w = put(w, 4, 2 * H, 3 * H, p["Wmx1h"])
    # block 5: decoder layer-2 z path: [Wa1z | Wbt1z | Wfs1z | Wmx1z]
    w = put(w, 5, 0, 0 * H, p["Wa1z"])
    w = put(w, 5, 0, 1 * H, p["Wbt1z"])
    w = put(w, 5, 0, 2 * H, p["Wfs1z"])
    w = put(w, 5, 0, 3 * H, p["Wmx1z"])
    # block 6: decoder output heads, block-diagonal over [ha | hbt | hfs | hmx]
    w = put(w, 6, 0 * H, 0 * P, p["Wa2"])
    w = put(w, 6, 1 * H, 1 * P, p["Wbt2"])
    w = put(w, 6, 2 * H, 2 * P, p["Wfs2"])
    w = put(w, 6, 3 * H, 3 * P, p["Wmx2"])
    w_slab = w.astype(jnp.bfloat16)

    c = jnp.zeros((C_ROWS, LANE), jnp.float32)
    c = c.at[_R_B0, 0:H].set(p["be1"][0])
    c = c.at[_R_B1M, 0:L].set(p["bzm"][0])
    c = c.at[_R_B1V, 0:L].set(p["bzv"][0])
    c = c.at[_R_B2, 0:H].set(p["bb1"][0])
    c = c.at[_R_B2, H:2 * H].set(p["bf1"][0])
    c = c.at[_R_B2, 2 * H:3 * H].set(p["bm1"][0])
    c = c.at[_R_B3, 0:H].set(p["ba1"][0])
    c = c.at[_R_B3, H:2 * H].set(p["bbt1"][0])
    c = c.at[_R_B3, 2 * H:3 * H].set(p["bfs1"][0])
    c = c.at[_R_B3, 3 * H:4 * H].set(p["bmx1"][0])
    c = c.at[_R_B4, 0:P].set(p["ba2"][0])
    c = c.at[_R_B4, P:2 * P].set(p["bbt2"][0])
    c = c.at[_R_B4, 2 * P:3 * P].set(p["bfs2"][0])
    c = c.at[_R_B4, 3 * P:4 * P].set(p["bmx2"][0])

    # parameter-only transcendentals hoisted out of the kernel
    theta = jnp.exp(p["py_r"][0])
    beta_pr = jnp.exp(p["log_beta_prior"][0])
    c = c.at[_R_THETA, 0:P].set(theta)
    c = c.at[_R_LOG_THETA, 0:P].set(jnp.log(theta + EPS))
    c = c.at[_R_LGAMMA_THETA, 0:P].set(gammaln(theta))
    c = c.at[_R_ALPHA_PR, 0:P].set(p["alpha_prior"][0])
    c = c.at[_R_RECIP_BETA_PR, 0:P].set(1.0 / beta_pr)
    c = c.at[_R_LOG_BETA_PR, 0:P].set(p["log_beta_prior"][0])
    return w_slab, c


# --------------------------------- wrapper -------------------------------------
@jax.jit
def proteinvi_forward(y, eps_z, eps_b, w_slab, c_slab):
    """Returns (reconst_loss_protein, kl_div_z, kl_div_back_pro, z)."""
    B = y.shape[0]
    P, L = N_OUTPUT_PROTEINS, N_LATENT
    b_pad = pl.cdiv(B, TILE_B) * TILE_B

    # one lane-aligned data slab: [y | eps_z | eps_b], each in its own 128-lane chunk
    # TODO(synk): a non-identity shared_features set would need a wrapper gather here.
    data = jnp.zeros((b_pad, 3 * LANE), jnp.float32)
    data = data.at[:B, 0:N_INPUT_PROTEINS].set(y)
    data = data.at[:B, LANE:LANE + L].set(eps_z)
    data = data.at[:B, 2 * LANE:2 * LANE + P].set(eps_b)

    grid = (b_pad // TILE_B,)
    out = pl.pallas_call(
        proteinvi_kernel,
        out_shape=jax.ShapeDtypeStruct((b_pad, LANE), jnp.float32),
        grid=grid,
        in_specs=[
            pl.BlockSpec((TILE_B, 3 * LANE), lambda i: (i, 0)),
            pl.BlockSpec((N_W_BLOCKS * LANE, LANE), lambda i: (0, 0)),
            pl.BlockSpec((C_ROWS, LANE), lambda i: (0, 0)),
        ],
        out_specs=pl.BlockSpec((TILE_B, LANE), lambda i: (i, 0)),
        compiler_params=pltpu.CompilerParams(
            dimension_semantics=("parallel",)),
    )(data, w_slab, c_slab)

    z = out[:B, 0:L]
    rec = out[:B, L]
    klz = out[:B, L + 1]
    klb = out[:B, L + 2]
    return rec, klz, klb, z


# --------------------------- pure-JAX reference check ---------------------------
def proteinvi_reference(y, eps_z, eps_b, p):
    """Straightforward per-layer reference; mirrors the kernel's bf16 matmul policy."""
    mm = lambda a, w: jnp.dot(a.astype(jnp.bfloat16), w.astype(jnp.bfloat16),
                              preferred_element_type=jnp.float32)
    relu = lambda t: jnp.maximum(t, 0.0)
    y_log = jnp.log(1.0 + y)
    h = relu(mm(y_log, p["We1"]) + p["be1"])
    qz_m = mm(h, p["Wzm"]) + p["bzm"]
    qz_v = jnp.exp(mm(h, p["Wzv"]) + p["bzv"]) + 1e-4
    z = jax.nn.softmax(qz_m + jnp.sqrt(qz_v) * eps_z, axis=-1)
    hb = relu(mm(z, p["Wb1"]) + p["bb1"])
    back_alpha = mm(relu(mm(hb, p["Wa1h"]) + mm(z, p["Wa1z"]) + p["ba1"]),
                    p["Wa2"]) + p["ba2"]
    back_beta = jnp.exp(mm(relu(mm(hb, p["Wbt1h"]) + mm(z, p["Wbt1z"]) + p["bbt1"]),
                           p["Wbt2"]) + p["bbt2"])
    rate_back = jnp.exp(back_alpha + back_beta * eps_b)
    hf = relu(mm(z, p["Wf1"]) + p["bf1"])
    fore_scale = relu(mm(relu(mm(hf, p["Wfs1h"]) + mm(z, p["Wfs1z"]) + p["bfs1"]),
                         p["Wfs2"]) + p["bfs2"]) + 1.0 + 1e-8
    rate_fore = rate_back * fore_scale
    hm = relu(mm(z, p["Wm1"]) + p["bm1"])
    mixing = mm(relu(mm(hm, p["Wmx1h"]) + mm(z, p["Wmx1z"]) + p["bmx1"]),
                p["Wmx2"]) + p["bmx2"]
    theta = jnp.exp(p["py_r"])
    x = y[:, jnp.asarray(SHARED_FEATURES)]
    eps = 1e-8
    lt1 = jnp.log(theta + rate_back + eps)
    lt2 = jnp.log(theta + rate_fore + eps)
    lg = gammaln(x + theta) - gammaln(theta) - gammaln(x + 1.0)
    log_nb1 = theta * (jnp.log(theta + eps) - lt1) + x * (jnp.log(rate_back + eps) - lt1) + lg
    log_nb2 = theta * (jnp.log(theta + eps) - lt2) + x * (jnp.log(rate_fore + eps) - lt2) + lg
    log_mix = jnp.logaddexp(log_nb1, log_nb2 - mixing) - jax.nn.softplus(-mixing)
    rec = jnp.sum(-log_mix, axis=-1)
    kl_z = jnp.sum(0.5 * (qz_v + qz_m * qz_m - 1.0 - jnp.log(qz_v)), axis=-1)
    beta_pr = jnp.exp(p["log_beta_prior"])
    vr = (back_beta / beta_pr) ** 2
    t1 = ((back_alpha - p["alpha_prior"]) / beta_pr) ** 2
    kl_b = jnp.sum(0.5 * (vr + t1 - 1.0 - jnp.log(vr)), axis=-1)
    return rec, kl_z, kl_b, z


if __name__ == "__main__":
    key = jax.random.PRNGKey(0)
    k_param, k_y, k_ez, k_eb = jax.random.split(key, 4)
    params = init_params(k_param)
    w_slab, c_slab = pack_params(params)

    # synthetic nonnegative protein counts + reparameterization noise
    y = jnp.floor(jax.random.uniform(k_y, (BATCH, N_INPUT_PROTEINS), jnp.float32) * 20.0)
    eps_z = jax.random.normal(k_ez, (BATCH, N_LATENT), jnp.float32)
    eps_b = jax.random.normal(k_eb, (BATCH, N_OUTPUT_PROTEINS), jnp.float32)

    rec, kl_z, kl_b, z = proteinvi_forward(y, eps_z, eps_b, w_slab, c_slab)
    jax.block_until_ready((rec, kl_z, kl_b, z))

    assert rec.shape == (BATCH,) and kl_z.shape == (BATCH,)
    assert kl_b.shape == (BATCH,) and z.shape == (BATCH, N_LATENT)

    rec_r, kl_z_r, kl_b_r, z_r = proteinvi_reference(y, eps_z, eps_b, params)
    for a, b in ((rec, rec_r), (kl_z, kl_z_r), (kl_b, kl_b_r), (z, z_r)):
        assert bool(jnp.all(jnp.isfinite(a)))
        assert bool(jnp.allclose(a, b, rtol=2e-2, atol=2e-2)), (a, b)

    print("KERNEL_OK")
</pallas_src>

<mosaic_0001>
module attributes {stable_mosaic.version = 11 : i64} {
  func.func @proteinvi_kernel(%arg0: i32, %arg1: memref<8x384xf32, #tpu.memory_space<vmem>>, %arg2: memref<896x128xbf16, #tpu.memory_space<vmem>>, %arg3: memref<16x128xf32, #tpu.memory_space<vmem>>, %arg4: memref<8x128xf32, #tpu.memory_space<vmem>>) attributes {dimension_semantics = [#tpu.dimension_semantics<parallel>], iteration_bounds = array<i64: 1>, scalar_prefetch = 0 : i64, scratch_operands = 0 : i64, tpu.core_type = #tpu.core_type<tc>, window_params = [{transform_indices = @transform_0, window_bounds = array<i64: 8, 384>}, {pipeline_mode = #tpu.pipeline_mode<synchronous>, transform_indices = @transform_1, window_bounds = array<i64: 896, 128>}, {pipeline_mode = #tpu.pipeline_mode<synchronous>, transform_indices = @transform_2, window_bounds = array<i64: 16, 128>}, {transform_indices = @transform_3, window_bounds = array<i64: 8, 128>}]} {
    %c0 = arith.constant 0 : index
    %c0_0 = arith.constant 0 : index
    %0 = vector.load %arg1[%c0, %c0_0] : memref<8x384xf32, #tpu.memory_space<vmem>>, vector<8x384xf32>
    %1 = vector.extract_strided_slice %0 {offsets = [0, 0], sizes = [8, 128], strides = [1, 1]} : vector<8x384xf32> to vector<8x128xf32>
    %2 = vector.extract_strided_slice %0 {offsets = [0, 128], sizes = [8, 128], strides = [1, 1]} : vector<8x384xf32> to vector<8x128xf32>
    %3 = vector.extract_strided_slice %0 {offsets = [0, 256], sizes = [8, 128], strides = [1, 1]} : vector<8x384xf32> to vector<8x128xf32>
    %c0_1 = arith.constant 0 : index
    %c0_2 = arith.constant 0 : index
    %4 = vector.load %arg3[%c0_1, %c0_2] : memref<16x128xf32, #tpu.memory_space<vmem>>, vector<16x128xf32>
    %5 = tpu.iota {dimensions = array<i32: 1>} : vector<8x128xi32>
    %cst = arith.constant 1.000000e+00 : f32
    %6 = vector.broadcast %cst : f32 to vector<8x128xf32>
    %7 = arith.addf %6, %1 : vector<8x128xf32>
    %8 = math.log %7 : vector<8x128xf32>
    %9 = arith.truncf %8 : vector<8x128xf32> to vector<8x128xbf16>
    %c0_3 = arith.constant 0 : index
    %c0_4 = arith.constant 0 : index
    %10 = vector.load %arg2[%c0_3, %c0_4] : memref<896x128xbf16, #tpu.memory_space<vmem>>, vector<128x128xbf16>
    %cst_5 = arith.constant dense<0.000000e+00> : vector<8x128xf32>
    %11 = tpu.matmul %9, %10, %cst_5 {dimension_numbers = #tpu.dot_dimension_numbers<[1], [0], [0], [1], [0, 0, 1, 1], [], []>} : vector<8x128xbf16>, vector<128x128xbf16>, vector<8x128xf32> -> vector<8x128xf32>
    %12 = vector.extract_strided_slice %4 {offsets = [0, 0], sizes = [1, 128], strides = [1, 1]} : vector<16x128xf32> to vector<1x128xf32>
    %13 = vector.broadcast %12 : vector<1x128xf32> to vector<8x128xf32>
    %14 = arith.addf %11, %13 : vector<8x128xf32>
    %cst_6 = arith.constant 0.000000e+00 : f32
    %15 = vector.broadcast %cst_6 : f32 to vector<8x128xf32>
    %16 = arith.maximumf %14, %15 : vector<8x128xf32>
    %17 = arith.truncf %16 : vector<8x128xf32> to vector<8x128xbf16>
    %c128 = arith.constant 128 : index
    %c0_7 = arith.constant 0 : index
    %18 = vector.load %arg2[%c128, %c0_7] : memref<896x128xbf16, #tpu.memory_space<vmem>>, vector<128x128xbf16>
    %cst_8 = arith.constant dense<0.000000e+00> : vector<8x128xf32>
    %19 = tpu.matmul %17, %18, %cst_8 {dimension_numbers = #tpu.dot_dimension_numbers<[1], [0], [0], [1], [0, 0, 1, 1], [], []>} : vector<8x128xbf16>, vector<128x128xbf16>, vector<8x128xf32> -> vector<8x128xf32>
    %20 = vector.extract_strided_slice %4 {offsets = [1, 0], sizes = [1, 128], strides = [1, 1]} : vector<16x128xf32> to vector<1x128xf32>
    %21 = vector.broadcast %20 : vector<1x128xf32> to vector<8x128xf32>
    %22 = arith.addf %19, %21 : vector<8x128xf32>
    %23 = arith.truncf %16 : vector<8x128xf32> to vector<8x128xbf16>
    %c256 = arith.constant 256 : index
    %c0_9 = arith.constant 0 : index
    %24 = vector.load %arg2[%c256, %c0_9] : memref<896x128xbf16, #tpu.memory_space<vmem>>, vector<128x128xbf16>
    %cst_10 = arith.constant dense<0.000000e+00> : vector<8x128xf32>
    %25 = tpu.matmul %23, %24, %cst_10 {dimension_numbers = #tpu.dot_dimension_numbers<[1], [0], [0], [1], [0, 0, 1, 1], [], []>} : vector<8x128xbf16>, vector<128x128xbf16>, vector<8x128xf32> -> vector<8x128xf32>
    %26 = vector.extract_strided_slice %4 {offsets = [2, 0], sizes = [1, 128], strides = [1, 1]} : vector<16x128xf32> to vector<1x128xf32>
    %27 = vector.broadcast %26 : vector<1x128xf32> to vector<8x128xf32>
    %28 = arith.addf %25, %27 : vector<8x128xf32>
    %29 = math.exp %28 : vector<8x128xf32>
    %cst_11 = arith.constant 9.99999974E-5 : f32
    %30 = vector.broadcast %cst_11 : f32 to vector<8x128xf32>
    %31 = arith.addf %29, %30 : vector<8x128xf32>
    %32 = math.sqrt %31 : vector<8x128xf32>
    %33 = arith.mulf %32, %2 : vector<8x128xf32>
    %34 = arith.addf %22, %33 : vector<8x128xf32>
    %c8_i32 = arith.constant 8 : i32
    %35 = vector.broadcast %c8_i32 : i32 to vector<8x128xi32>
    %36 = arith.cmpi slt, %5, %35 : vector<8x128xi32>
    %cst_12 = arith.constant -1.000000e+30 : f32
    %37 = vector.broadcast %cst_12 : f32 to vector<8x128xf32>
    %38 = arith.select %36, %34, %37 : vector<8x128xi1>, vector<8x128xf32>
    %cst_13 = arith.constant dense<0xFF800000> : vector<8xf32>
    %39 = vector.multi_reduction <maximumf>, %38, %cst_13 [1] : vector<8x128xf32> to vector<8xf32>
    %40 = vector.shape_cast %39 : vector<8xf32> to vector<8x1xf32>
    %41 = vector.broadcast %40 : vector<8x1xf32> to vector<8x128xf32>
    %42 = arith.subf %38, %41 : vector<8x128xf32>
    %43 = math.exp %42 : vector<8x128xf32>
    %cst_14 = arith.constant dense<0.000000e+00> : vector<8xf32>
    %44 = vector.multi_reduction <add>, %43, %cst_14 [1] : vector<8x128xf32> to vector<8xf32>
    %45 = vector.shape_cast %44 : vector<8xf32> to vector<8x1xf32>
    %46 = vector.broadcast %45 : vector<8x1xf32> to vector<8x128xf32>
    %47 = arith.divf %43, %46 : vector<8x128xf32>
    %48 = arith.truncf %47 : vector<8x128xf32> to vector<8x128xbf16>
    %c384 = arith.constant 384 : index
    %c0_15 = arith.constant 0 : index
    %49 = vector.load %arg2[%c384, %c0_15] : memref<896x128xbf16, #tpu.memory_space<vmem>>, vector<128x128xbf16>
    %cst_16 = arith.constant dense<0.000000e+00> : vector<8x128xf32>
    %50 = tpu.matmul %48, %49, %cst_16 {dimension_numbers = #tpu.dot_dimension_numbers<[1], [0], [0], [1], [0, 0, 1, 1], [], []>} : vector<8x128xbf16>, vector<128x128xbf16>, vector<8x128xf32> -> vector<8x128xf32>
    %51 = vector.extract_strided_slice %4 {offsets = [3, 0], sizes = [1, 128], strides = [1, 1]} : vector<16x128xf32> to vector<1x128xf32>
    %52 = vector.broadcast %51 : vector<1x128xf32> to vector<8x128xf32>
    %53 = arith.addf %50, %52 : vector<8x128xf32>
    %cst_17 = arith.constant 0.000000e+00 : f32
    %54 = vector.broadcast %cst_17 : f32 to vector<8x128xf32>
    %55 = arith.maximumf %53, %54 : vector<8x128xf32>
    %56 = arith.truncf %55 : vector<8x128xf32> to vector<8x128xbf16>
    %c512 = arith.constant 512 : index
    %c0_18 = arith.constant 0 : index
    %57 = vector.load %arg2[%c512, %c0_18] : memref<896x128xbf16, #tpu.memory_space<vmem>>, vector<128x128xbf16>
    %cst_19 = arith.constant dense<0.000000e+00> : vector<8x128xf32>
    %58 = tpu.matmul %56, %57, %cst_19 {dimension_numbers = #tpu.dot_dimension_numbers<[1], [0], [0], [1], [0, 0, 1, 1], [], []>} : vector<8x128xbf16>, vector<128x128xbf16>, vector<8x128xf32> -> vector<8x128xf32>
    %59 = arith.truncf %47 : vector<8x128xf32> to vector<8x128xbf16>
    %c640 = arith.constant 640 : index
    %c0_20 = arith.constant 0 : index
    %60 = vector.load %arg2[%c640, %c0_20] : memref<896x128xbf16, #tpu.memory_space<vmem>>, vector<128x128xbf16>
    %cst_21 = arith.constant dense<0.000000e+00> : vector<8x128xf32>
    %61 = tpu.matmul %59, %60, %cst_21 {dimension_numbers = #tpu.dot_dimension_numbers<[1], [0], [0], [1], [0, 0, 1, 1], [], []>} : vector<8x128xbf16>, vector<128x128xbf16>, vector<8x128xf32> -> vector<8x128xf32>
    %62 = arith.addf %58, %61 : vector<8x128xf32>
    %63 = vector.extract_strided_slice %4 {offsets = [4, 0], sizes = [1, 128], strides = [1, 1]} : vector<16x128xf32> to vector<1x128xf32>
    %64 = vector.broadcast %63 : vector<1x128xf32> to vector<8x128xf32>
    %65 = arith.addf %62, %64 : vector<8x128xf32>
    %cst_22 = arith.constant 0.000000e+00 : f32
    %66 = vector.broadcast %cst_22 : f32 to vector<8x128xf32>
    %67 = arith.maximumf %65, %66 : vector<8x128xf32>
    %68 = arith.truncf %67 : vector<8x128xf32> to vector<8x128xbf16>
    %c768 = arith.constant 768 : index
    %c0_23 = arith.constant 0 : index
    %69 = vector.load %arg2[%c768, %c0_23] : memref<896x128xbf16, #tpu.memory_space<vmem>>, vector<128x128xbf16>
    %cst_24 = arith.constant dense<0.000000e+00> : vector<8x128xf32>
    %70 = tpu.matmul %68, %69, %cst_24 {dimension_numbers = #tpu.dot_dimension_numbers<[1], [0], [0], [1], [0, 0, 1, 1], [], []>} : vector<8x128xbf16>, vector<128x128xbf16>, vector<8x128xf32> -> vector<8x128xf32>
    %71 = vector.extract_strided_slice %4 {offsets = [5, 0], sizes = [1, 128], strides = [1, 1]} : vector<16x128xf32> to vector<1x128xf32>
    %72 = vector.broadcast %71 : vector<1x128xf32> to vector<8x128xf32>
    %73 = arith.addf %70, %72 : vector<8x128xf32>
    %74 = vector.extract_strided_slice %73 {offsets = [0, 0], sizes = [8, 16], strides = [1, 1]} : vector<8x128xf32> to vector<8x16xf32>
    %75 = vector.extract_strided_slice %73 {offsets = [0, 16], sizes = [8, 16], strides = [1, 1]} : vector<8x128xf32> to vector<8x16xf32>
    %76 = vector.extract_strided_slice %73 {offsets = [0, 32], sizes = [8, 16], strides = [1, 1]} : vector<8x128xf32> to vector<8x16xf32>
    %77 = vector.extract_strided_slice %73 {offsets = [0, 48], sizes = [8, 16], strides = [1, 1]} : vector<8x128xf32> to vector<8x16xf32>
    %78 = vector.extract_strided_slice %1 {offsets = [0, 0], sizes = [8, 16], strides = [1, 1]} : vector<8x128xf32> to vector<8x16xf32>
    %79 = vector.extract_strided_slice %3 {offsets = [0, 0], sizes = [8, 16], strides = [1, 1]} : vector<8x128xf32> to vector<8x16xf32>
    %80 = vector.extract_strided_slice %4 {offsets = [6, 0], sizes = [1, 16], strides = [1, 1]} : vector<16x128xf32> to vector<1x16xf32>
    %81 = vector.extract_strided_slice %4 {offsets = [7, 0], sizes = [1, 16], strides = [1, 1]} : vector<16x128xf32> to vector<1x16xf32>
    %82 = vector.extract_strided_slice %4 {offsets = [8, 0], sizes = [1, 16], strides = [1, 1]} : vector<16x128xf32> to vector<1x16xf32>
    %83 = vector.extract_strided_slice %4 {offsets = [9, 0], sizes = [1, 16], strides = [1, 1]} : vector<16x128xf32> to vector<1x16xf32>
    %84 = vector.extract_strided_slice %4 {offsets = [10, 0], sizes = [1, 16], strides = [1, 1]} : vector<16x128xf32> to vector<1x16xf32>
    %85 = vector.extract_strided_slice %4 {offsets = [11, 0], sizes = [1, 16], strides = [1, 1]} : vector<16x128xf32> to vector<1x16xf32>
    %86 = math.exp %75 : vector<8x16xf32>
    %87 = arith.mulf %86, %79 : vector<8x16xf32>
    %88 = arith.addf %74, %87 : vector<8x16xf32>
    %89 = math.exp %88 : vector<8x16xf32>
    %cst_25 = arith.constant 0.000000e+00 : f32
    %90 = vector.broadcast %cst_25 : f32 to vector<8x16xf32>
    %91 = arith.maximumf %76, %90 : vector<8x16xf32>
    %cst_26 = arith.constant 1.000000e+00 : f32
    %92 = vector.broadcast %cst_26 : f32 to vector<8x16xf32>
    %93 = arith.addf %91, %92 : vector<8x16xf32>
    %cst_27 = arith.constant 9.99999993E-9 : f32
    %94 = vector.broadcast %cst_27 : f32 to vector<8x16xf32>
    %95 = arith.addf %93, %94 : vector<8x16xf32>
    %96 = arith.mulf %89, %95 : vector<8x16xf32>
    %97 = vector.broadcast %80 : vector<1x16xf32> to vector<8x16xf32>
    %98 = arith.addf %97, %89 : vector<8x16xf32>
    %cst_28 = arith.constant 9.99999993E-9 : f32
    %99 = vector.broadcast %cst_28 : f32 to vector<8x16xf32>
    %100 = arith.addf %98, %99 : vector<8x16xf32>
    %101 = math.log %100 : vector<8x16xf32>
    %102 = vector.broadcast %80 : vector<1x16xf32> to vector<8x16xf32>
    %103 = arith.addf %102, %96 : vector<8x16xf32>
    %cst_29 = arith.constant 9.99999993E-9 : f32
    %104 = vector.broadcast %cst_29 : f32 to vector<8x16xf32>
    %105 = arith.addf %103, %104 : vector<8x16xf32>
    %106 = math.log %105 : vector<8x16xf32>
    %107 = vector.broadcast %80 : vector<1x16xf32> to vector<8x16xf32>
    %108 = arith.addf %78, %107 : vector<8x16xf32>
    %cst_30 = arith.constant 2.000000e+00 : f32
    %109 = vector.broadcast %cst_30 : f32 to vector<8x16xf32>
    %110 = arith.addf %108, %109 : vector<8x16xf32>
    %111 = tpu.reciprocal %110 {approx = true} : vector<8x16xf32> -> vector<8x16xf32>
    %112 = arith.mulf %111, %111 : vector<8x16xf32>
    %cst_31 = arith.constant 0.00277777785 : f32
    %113 = vector.broadcast %cst_31 : f32 to vector<8x16xf32>
    %114 = arith.mulf %112, %113 : vector<8x16xf32>
    %cst_32 = arith.constant 0.0833333358 : f32
    %115 = vector.broadcast %cst_32 : f32 to vector<8x16xf32>
    %116 = arith.subf %115, %114 : vector<8x16xf32>
    %117 = arith.mulf %111, %116 : vector<8x16xf32>
    %cst_33 = arith.constant 5.000000e-01 : f32
    %118 = vector.broadcast %cst_33 : f32 to vector<8x16xf32>
    %119 = arith.subf %110, %118 : vector<8x16xf32>
    %120 = math.log %110 : vector<8x16xf32>
    %121 = arith.mulf %119, %120 : vector<8x16xf32>
    %122 = arith.subf %121, %110 : vector<8x16xf32>
    %cst_34 = arith.constant 0.918938517 : f32
    %123 = vector.broadcast %cst_34 : f32 to vector<8x16xf32>
    %124 = arith.addf %122, %123 : vector<8x16xf32>
    %125 = arith.addf %124, %117 : vector<8x16xf32>
    %cst_35 = arith.constant 1.000000e+00 : f32
    %126 = vector.broadcast %cst_35 : f32 to vector<8x16xf32>
    %127 = arith.addf %108, %126 : vector<8x16xf32>
    %128 = arith.mulf %108, %127 : vector<8x16xf32>
    %129 = math.log %128 : vector<8x16xf32>
    %130 = arith.subf %125, %129 : vector<8x16xf32>
    %131 = vector.broadcast %82 : vector<1x16xf32> to vector<8x16xf32>
    %132 = arith.subf %130, %131 : vector<8x16xf32>
    %cst_36 = arith.constant 1.000000e+00 : f32
    %133 = vector.broadcast %cst_36 : f32 to vector<8x16xf32>
    %134 = arith.addf %78, %133 : vector<8x16xf32>
    %cst_37 = arith.constant 2.000000e+00 : f32
    %135 = vector.broadcast %cst_37 : f32 to vector<8x16xf32>
    %136 = arith.addf %134, %135 : vector<8x16xf32>
    %137 = tpu.reciprocal %136 {approx = true} : vector<8x16xf32> -> vector<8x16xf32>
    %138 = arith.mulf %137, %137 : vector<8x16xf32>
    %cst_38 = arith.constant 0.00277777785 : f32
    %139 = vector.broadcast %cst_38 : f32 to vector<8x16xf32>
    %140 = arith.mulf %138, %139 : vector<8x16xf32>
    %cst_39 = arith.constant 0.0833333358 : f32
    %141 = vector.broadcast %cst_39 : f32 to vector<8x16xf32>
    %142 = arith.subf %141, %140 : vector<8x16xf32>
    %143 = arith.mulf %137, %142 : vector<8x16xf32>
    %cst_40 = arith.constant 5.000000e-01 : f32
    %144 = vector.broadcast %cst_40 : f32 to vector<8x16xf32>
    %145 = arith.subf %136, %144 : vector<8x16xf32>
    %146 = math.log %136 : vector<8x16xf32>
    %147 = arith.mulf %145, %146 : vector<8x16xf32>
    %148 = arith.subf %147, %136 : vector<8x16xf32>
    %cst_41 = arith.constant 0.918938517 : f32
    %149 = vector.broadcast %cst_41 : f32 to vector<8x16xf32>
    %150 = arith.addf %148, %149 : vector<8x16xf32>
    %151 = arith.addf %150, %143 : vector<8x16xf32>
    %cst_42 = arith.constant 1.000000e+00 : f32
    %152 = vector.broadcast %cst_42 : f32 to vector<8x16xf32>
    %153 = arith.addf %134, %152 : vector<8x16xf32>
    %154 = arith.mulf %134, %153 : vector<8x16xf32>
    %155 = math.log %154 : vector<8x16xf32>
    %156 = arith.subf %151, %155 : vector<8x16xf32>
    %157 = arith.subf %132, %156 : vector<8x16xf32>
    %158 = vector.broadcast %81 : vector<1x16xf32> to vector<8x16xf32>
    %159 = arith.subf %158, %101 : vector<8x16xf32>
    %160 = vector.broadcast %80 : vector<1x16xf32> to vector<8x16xf32>
    %161 = arith.mulf %160, %159 : vector<8x16xf32>
    %cst_43 = arith.constant 9.99999993E-9 : f32
    %162 = vector.broadcast %cst_43 : f32 to vector<8x16xf32>
    %163 = arith.addf %89, %162 : vector<8x16xf32>
    %164 = math.log %163 : vector<8x16xf32>
    %165 = arith.subf %164, %101 : vector<8x16xf32>
    %166 = arith.mulf %78, %165 : vector<8x16xf32>
    %167 = arith.addf %161, %166 : vector<8x16xf32>
    %168 = arith.addf %167, %157 : vector<8x16xf32>
    %169 = vector.broadcast %81 : vector<1x16xf32> to vector<8x16xf32>
    %170 = arith.subf %169, %106 : vector<8x16xf32>
    %171 = vector.broadcast %80 : vector<1x16xf32> to vector<8x16xf32>
    %172 = arith.mulf %171, %170 : vector<8x16xf32>
    %cst_44 = arith.constant 9.99999993E-9 : f32
    %173 = vector.broadcast %cst_44 : f32 to vector<8x16xf32>
    %174 = arith.addf %96, %173 : vector<8x16xf32>
    %175 = math.log %174 : vector<8x16xf32>
    %176 = arith.subf %175, %106 : vector<8x16xf32>
    %177 = arith.mulf %78, %176 : vector<8x16xf32>
    %178 = arith.addf %172, %177 : vector<8x16xf32>
    %179 = arith.addf %178, %157 : vector<8x16xf32>
    %180 = arith.subf %179, %77 : vector<8x16xf32>
    %181 = arith.maximumf %168, %180 : vector<8x16xf32>
    %182 = arith.subf %168, %180 : vector<8x16xf32>
    %183 = math.absf %182 : vector<8x16xf32>
    %cst_45 = arith.constant 0.000000e+00 : f32
    %184 = vector.broadcast %cst_45 : f32 to vector<8x16xf32>
    %185 = arith.subf %184, %183 : vector<8x16xf32>
    %186 = math.exp %185 : vector<8x16xf32>
    %cst_46 = arith.constant 1.000000e+00 : f32
    %187 = vector.broadcast %cst_46 : f32 to vector<8x16xf32>
    %188 = arith.addf %187, %186 : vector<8x16xf32>
    %189 = math.log %188 : vector<8x16xf32>
    %190 = arith.addf %181, %189 : vector<8x16xf32>
    %cst_47 = arith.constant 0.000000e+00 : f32
    %191 = vector.broadcast %cst_47 : f32 to vector<8x16xf32>
    %192 = arith.subf %191, %77 : vector<8x16xf32>
    %cst_48 = arith.constant 0.000000e+00 : f32
    %193 = vector.broadcast %cst_48 : f32 to vector<8x16xf32>
    %194 = arith.maximumf %192, %193 : vector<8x16xf32>
    %195 = math.absf %77 : vector<8x16xf32>
    %cst_49 = arith.constant 0.000000e+00 : f32
    %196 = vector.broadcast %cst_49 : f32 to vector<8x16xf32>
    %197 = arith.subf %196, %195 : vector<8x16xf32>
    %198 = math.exp %197 : vector<8x16xf32>
    %cst_50 = arith.constant 1.000000e+00 : f32
    %199 = vector.broadcast %cst_50 : f32 to vector<8x16xf32>
    %200 = arith.addf %199, %198 : vector<8x16xf32>
    %201 = math.log %200 : vector<8x16xf32>
    %202 = arith.addf %194, %201 : vector<8x16xf32>
    %203 = arith.subf %202, %190 : vector<8x16xf32>
    %cst_51 = arith.constant dense<0.000000e+00> : vector<8xf32>
    %204 = vector.multi_reduction <add>, %203, %cst_51 [1] : vector<8x16xf32> to vector<8xf32>
    %205 = vector.shape_cast %204 : vector<8xf32> to vector<8x1xf32>
    %206 = vector.extract_strided_slice %22 {offsets = [0, 0], sizes = [8, 8], strides = [1, 1]} : vector<8x128xf32> to vector<8x8xf32>
    %207 = vector.extract_strided_slice %31 {offsets = [0, 0], sizes = [8, 8], strides = [1, 1]} : vector<8x128xf32> to vector<8x8xf32>
    %208 = arith.mulf %206, %206 : vector<8x8xf32>
    %209 = arith.addf %207, %208 : vector<8x8xf32>
    %cst_52 = arith.constant 1.000000e+00 : f32
    %210 = vector.broadcast %cst_52 : f32 to vector<8x8xf32>
    %211 = arith.subf %209, %210 : vector<8x8xf32>
    %212 = math.log %207 : vector<8x8xf32>
    %213 = arith.subf %211, %212 : vector<8x8xf32>
    %cst_53 = arith.constant 5.000000e-01 : f32
    %214 = vector.broadcast %cst_53 : f32 to vector<8x8xf32>
    %215 = arith.mulf %214, %213 : vector<8x8xf32>
    %cst_54 = arith.constant dense<0.000000e+00> : vector<8xf32>
    %216 = vector.multi_reduction <add>, %215, %cst_54 [1] : vector<8x8xf32> to vector<8xf32>
    %217 = vector.shape_cast %216 : vector<8xf32> to vector<8x1xf32>
    %218 = vector.broadcast %84 : vector<1x16xf32> to vector<8x16xf32>
    %219 = arith.mulf %86, %218 : vector<8x16xf32>
    %220 = vector.broadcast %83 : vector<1x16xf32> to vector<8x16xf32>
    %221 = arith.subf %74, %220 : vector<8x16xf32>
    %222 = vector.broadcast %84 : vector<1x16xf32> to vector<8x16xf32>
    %223 = arith.mulf %221, %222 : vector<8x16xf32>
    %224 = arith.mulf %219, %219 : vector<8x16xf32>
    %225 = arith.mulf %223, %223 : vector<8x16xf32>
    %226 = arith.addf %224, %225 : vector<8x16xf32>
    %cst_55 = arith.constant 1.000000e+00 : f32
    %227 = vector.broadcast %cst_55 : f32 to vector<8x16xf32>
    %228 = arith.subf %226, %227 : vector<8x16xf32>
    %cst_56 = arith.constant 5.000000e-01 : f32
    %229 = vector.broadcast %cst_56 : f32 to vector<8x16xf32>
    %230 = arith.mulf %229, %228 : vector<8x16xf32>
    %231 = vector.broadcast %85 : vector<1x16xf32> to vector<8x16xf32>
    %232 = arith.subf %75, %231 : vector<8x16xf32>
    %233 = arith.subf %230, %232 : vector<8x16xf32>
    %cst_57 = arith.constant dense<0.000000e+00> : vector<8xf32>
    %234 = vector.multi_reduction <add>, %233, %cst_57 [1] : vector<8x16xf32> to vector<8xf32>
    %235 = vector.shape_cast %234 : vector<8xf32> to vector<8x1xf32>
    %c8_i32_58 = arith.constant 8 : i32
    %236 = vector.broadcast %c8_i32_58 : i32 to vector<8x128xi32>
    %237 = arith.cmpi eq, %5, %236 : vector<8x128xi32>
    %cst_59 = arith.constant 0.000000e+00 : f32
    %238 = vector.shape_cast %205 : vector<8x1xf32> to vector<8x1xf32>
    %239 = vector.broadcast %238 : vector<8x1xf32> to vector<8x128xf32>
    %240 = vector.broadcast %cst_59 : f32 to vector<8x128xf32>
    %241 = arith.select %237, %239, %240 : vector<8x128xi1>, vector<8x128xf32>
    %242 = arith.addf %47, %241 : vector<8x128xf32>
    %c9_i32 = arith.constant 9 : i32
    %243 = vector.broadcast %c9_i32 : i32 to vector<8x128xi32>
    %244 = arith.cmpi eq, %5, %243 : vector<8x128xi32>
    %cst_60 = arith.constant 0.000000e+00 : f32
    %245 = vector.shape_cast %217 : vector<8x1xf32> to vector<8x1xf32>
    %246 = vector.broadcast %245 : vector<8x1xf32> to vector<8x128xf32>
    %247 = vector.broadcast %cst_60 : f32 to vector<8x128xf32>
    %248 = arith.select %244, %246, %247 : vector<8x128xi1>, vector<8x128xf32>
    %249 = arith.addf %242, %248 : vector<8x128xf32>
    %c10_i32 = arith.constant 10 : i32
    %250 = vector.broadcast %c10_i32 : i32 to vector<8x128xi32>
    %251 = arith.cmpi eq, %5, %250 : vector<8x128xi32>
    %cst_61 = arith.constant 0.000000e+00 : f32
    %252 = vector.shape_cast %235 : vector<8x1xf32> to vector<8x1xf32>
    %253 = vector.broadcast %252 : vector<8x1xf32> to vector<8x128xf32>
    %254 = vector.broadcast %cst_61 : f32 to vector<8x128xf32>
    %255 = arith.select %251, %253, %254 : vector<8x128xi1>, vector<8x128xf32>
    %256 = arith.addf %249, %255 : vector<8x128xf32>
    %c0_62 = arith.constant 0 : index
    %c0_63 = arith.constant 0 : index
    %257 = vector.load %arg4[%c0_62, %c0_63] : memref<8x128xf32, #tpu.memory_space<vmem>>, vector<8x128xf32>
    tpu.vector_store %arg4[%c0_62, %c0_63], %256 {strides = array<i32>} : memref<8x128xf32, #tpu.memory_space<vmem>>, vector<8x128xf32>,
    return
  }
  func.func @transform_0(%arg0: i32) -> (i32, i32) {
    %c0_i32 = arith.constant 0 : i32
    %c0_i32_0 = arith.constant 0 : i32
    return %arg0, %c0_i32 : i32, i32
  }
  func.func @transform_1(%arg0: i32) -> (i32, i32) {
    %c0_i32 = arith.constant 0 : i32
    %c0_i32_0 = arith.constant 0 : i32
    %c0_i32_1 = arith.constant 0 : i32
    return %c0_i32, %c0_i32_0 : i32, i32
  }
  func.func @transform_2(%arg0: i32) -> (i32, i32) {
    %c0_i32 = arith.constant 0 : i32
    %c0_i32_0 = arith.constant 0 : i32
    %c0_i32_1 = arith.constant 0 : i32
    return %c0_i32, %c0_i32_0 : i32, i32
  }
  func.func @transform_3(%arg0: i32) -> (i32, i32) {
    %c0_i32 = arith.constant 0 : i32
    %c0_i32_0 = arith.constant 0 : i32
    return %arg0, %c0_i32 : i32, i32
  }
}

</mosaic_0001>

<llo_original>
// kernel: proteinvi_forward.1
$region0: #{proteinvi_forward.1}
  #allocation0 [shape = 'u32[]', space=smem, size = 0x4, offset = 0x4, fixed_abs, tag = 'smem constant byte address 0x4 - core index']
  #allocation1 [shape = 'u32[72,128]{1,0:T(1,128)}', space=vmem, size = 0x9000, scoped, tag = 'internal scratch']
  %s0 = inlined_call_operand.vmem [shape: f32[8,384], index: 0, kind: input, shape index: {}]
  %s1 = inlined_call_operand.hbm [shape: bf16[896,128], index: 1, kind: input, shape index: {}]
  %s2 = inlined_call_operand.vmem [shape: f32[16,128], index: 2, kind: input, shape index: {}]
  %s3 = inlined_call_operand.vmem [shape: f32[8,128], index: 3, kind: output, shape index: {}]
  %s4 = sld [smem:[#allocation0]]
  $region26: #{proteinvi_forward.1} parent=0
    _
  %s6 = ssub.s32 1, %s4
  %s7 = scalar_select 0, %s6, %s4
  $region1: #{proteinvi_forward.1} parent=0
    #allocation2 [shape = 'u8[229376]{0}', space=vmem, size = 0x38000, scoped, tag = 'input window, operand 1, single buffered']
    #allocation3 [shape = 's32[1]{0}', space=sflag, size = 0x4, scoped, tag = 'scoped memory for proteinvi_forward.1']
    %8 = vsyncpa [#allocation3], 0
    // Predicated region
    $region2: #{proteinvi_forward.1} parent=1 // pred_check
      _
    $region3: #{proteinvi_forward.1} parent=1 // pred_check_branch
      %10 = sbr.rel (0) target = $region5
    $region4: #{proteinvi_forward.1} parent=1 // pred_region
      _
    $region5: #{proteinvi_forward.1} parent=1 // pred_fallthru
      _
    // Predicated region
    $region6: #{proteinvi_forward.1} parent=1 // pred_check
      _
    $region7: #{proteinvi_forward.1} parent=1 // pred_check_branch
      %12 = sbr.rel (0) target = $region9
    $region8: #{proteinvi_forward.1} parent=1 // pred_region
      %14 = vsyncadd [#allocation3], 0
      %s15 = sshll.u32 %s1, 4
      %s16 = int_to_ptr.hbm [resolvable:$true] %s15
      %s17 = sshll.u32 [#allocation2], 4
      %s18 = int_to_ptr.vmem [resolvable:$true] %s17
      %23 = dma.hbm_to_vmem [thread:$0]  %s16, 7168, %s18, [#allocation3], 64, 64, 4
    $region9: #{proteinvi_forward.1} parent=1 // pred_fallthru
      _
    // Predicated region
    $region10: #{proteinvi_forward.1} parent=1 // pred_check
      _
    $region11: #{proteinvi_forward.1} parent=1 // pred_check_branch
      %25 = sbr.rel (0) target = $region13
    $region12: #{proteinvi_forward.1} parent=1 // pred_region
      _
    $region13: #{proteinvi_forward.1} parent=1 // pred_fallthru
      _
    // Predicated region
    $region14: #{proteinvi_forward.1} parent=1 // pred_check
      _
    $region15: #{proteinvi_forward.1} parent=1 // pred_check_branch
      %27 = sbr.rel (0) target = $region17
    $region16: #{proteinvi_forward.1} parent=1 // pred_region
      %29 = dma.done [#allocation3], 7168
    $region17: #{proteinvi_forward.1} parent=1 // pred_fallthru
      _
    %v30 = vld [vmem:[%s0] sm:$0xff]
    %v31 = vld [vmem:[%s0 + $0x8] sm:$0xff]
    %v32 = vld [vmem:[%s0 + $0x10] sm:$0xff]
    %v33 = vld [vmem:[%s2] sm:$0xff]
    %v34 = vld [vmem:[%s2 + $0x8] sm:$0xff]
    %v35 = vlaneseq
    %v36 = vand.u32 %v35, 127
    %v37 = vadd.f32 %v30, 1.0
    %v38 = vlog2.pop %v37
    %v39 = vmul.f32 %v38, 0.6931472
    %v40 = vpack.c.bf16 %v39, %v39
    %v41 = vld [vmem:[#allocation2] sm:$0xf]
    %v42 = vld [vmem:[#allocation2 + $0x4] sm:$0xf]
    %v43 = vld [vmem:[#allocation2 + $0x8] sm:$0xf]
    %v44 = vld [vmem:[#allocation2 + $0xc] sm:$0xf]
    %v45 = vld [vmem:[#allocation2 + $0x10] sm:$0xf]
    %v46 = vld [vmem:[#allocation2 + $0x14] sm:$0xf]
    %v47 = vld [vmem:[#allocation2 + $0x18] sm:$0xf]
    %v48 = vld [vmem:[#allocation2 + $0x1c] sm:$0xf]
    %v49 = vld [vmem:[#allocation2 + $0x20] sm:$0xf]
    %v50 = vld [vmem:[#allocation2 + $0x24] sm:$0xf]
    %v51 = vld [vmem:[#allocation2 + $0x28] sm:$0xf]
    %v52 = vld [vmem:[#allocation2 + $0x2c] sm:$0xf]
    %v53 = vld [vmem:[#allocation2 + $0x30] sm:$0xf]
    %v54 = vld [vmem:[#allocation2 + $0x34] sm:$0xf]
    %v55 = vld [vmem:[#allocation2 + $0x38] sm:$0xf]
    %v56 = vld [vmem:[#allocation2 + $0x3c] sm:$0xf]
    %v57 = vperm.slane %v33, 0
    %v74 = vunpack.c.l.b16 %v41
    %v75 = vunpack.c.l.b16 %v42
    %v76 = vunpack.c.l.b16 %v43
    %v77 = vunpack.c.l.b16 %v44
    %v78 = vunpack.c.l.b16 %v45
    %v79 = vunpack.c.l.b16 %v46
    %v80 = vunpack.c.l.b16 %v47
    %v81 = vunpack.c.l.b16 %v48
    %v82 = vunpack.c.l.b16 %v49
    %v83 = vunpack.c.l.b16 %v50
    %v84 = vunpack.c.l.b16 %v51
    %v85 = vunpack.c.l.b16 %v52
    %v86 = vunpack.c.l.b16 %v53
    %v87 = vunpack.c.l.b16 %v54
    %v88 = vunpack.c.l.b16 %v55
    %v89 = vunpack.c.l.b16 %v56
    %v90 = vpack.c.b16 %v75, %v74
    %v91 = vpack.c.b16 %v77, %v76
    %v92 = vpack.c.b16 %v79, %v78
    %v93 = vpack.c.b16 %v81, %v80
    %v94 = vpack.c.b16 %v83, %v82
    %v95 = vpack.c.b16 %v85, %v84
    %v96 = vpack.c.b16 %v87, %v86
    %v97 = vpack.c.b16 %v89, %v88
    %106 = vmatpush.bf16.msra.mxu0 %v97
    %107 = vmatpush.bf16.msra.mxu0 %v96
    %108 = vmatpush.bf16.msra.mxu0 %v95
    %109 = vmatpush.bf16.msra.mxu0 %v94
    %110 = vmatpush.bf16.msra.mxu0 %v93
    %111 = vmatpush.bf16.msra.mxu0 %v92
    %112 = vmatpush.bf16.msra.mxu0 %v91
    %113 = vmatpush.bf16.msra.mxu0 %v90
    %114 = vmatmul.bf16.gmra.mxu0 %v40
    %v115 = vpop.f32.mrf.mxu0
    %v116 = vadd.f32 %v57, %v115
    %v117 = vpop.f32.mrf.mxu0
    %118 = vdwg.mxu0
    %v119 = vmax.f32 %v116, 0.0
    %v120 = vpack.c.bf16 %v119, %v119
    %v121 = vld [vmem:[#allocation2 + $0x40] sm:$0xf]
    %v122 = vld [vmem:[#allocation2 + $0x44] sm:$0xf]
    %v123 = vld [vmem:[#allocation2 + $0x48] sm:$0xf]
    %v124 = vld [vmem:[#allocation2 + $0x4c] sm:$0xf]
    %v125 = vld [vmem:[#allocation2 + $0x50] sm:$0xf]
    %v126 = vld [vmem:[#allocation2 + $0x54] sm:$0xf]
    %v127 = vld [vmem:[#allocation2 + $0x58] sm:$0xf]
    %v128 = vld [vmem:[#allocation2 + $0x5c] sm:$0xf]
    %v129 = vld [vmem:[#allocation2 + $0x60] sm:$0xf]
    %v130 = vld [vmem:[#allocation2 + $0x64] sm:$0xf]
    %v131 = vld [vmem:[#allocation2 + $0x68] sm:$0xf]
    %v132 = vld [vmem:[#allocation2 + $0x6c] sm:$0xf]
    %v133 = vld [vmem:[#allocation2 + $0x70] sm:$0xf]
    %v134 = vld [vmem:[#allocation2 + $0x74] sm:$0xf]
    %v135 = vld [vmem:[#allocation2 + $0x78] sm:$0xf]
    %v136 = vld [vmem:[#allocation2 + $0x7c] sm:$0xf]
    %v137 = vperm.slane %v33, 1
    %v154 = vunpack.c.l.b16 %v121
    %v155 = vunpack.c.l.b16 %v122
    %v156 = vunpack.c.l.b16 %v123
    %v157 = vunpack.c.l.b16 %v124
    %v158 = vunpack.c.l.b16 %v125
    %v159 = vunpack.c.l.b16 %v126
    %v160 = vunpack.c.l.b16 %v127
    %v161 = vunpack.c.l.b16 %v128
    %v162 = vunpack.c.l.b16 %v129
    %v163 = vunpack.c.l.b16 %v130
    %v164 = vunpack.c.l.b16 %v131
    %v165 = vunpack.c.l.b16 %v132
    %v166 = vunpack.c.l.b16 %v133
    %v167 = vunpack.c.l.b16 %v134
    %v168 = vunpack.c.l.b16 %v135
    %v169 = vunpack.c.l.b16 %v136
    %v170 = vpack.c.b16 %v155, %v154
    %v171 = vpack.c.b16 %v157, %v156
    %v172 = vpack.c.b16 %v159, %v158
    %v173 = vpack.c.b16 %v161, %v160
    %v174 = vpack.c.b16 %v163, %v162
    %v175 = vpack.c.b16 %v165, %v164
    %v176 = vpack.c.b16 %v167, %v166
    %v177 = vpack.c.b16 %v169, %v168
    %186 = vmatpush.bf16.msra.mxu0 %v177
    %187 = vmatpush.bf16.msra.mxu0 %v176
    %188 = vmatpush.bf16.msra.mxu0 %v175
    %189 = vmatpush.bf16.msra.mxu0 %v174
    %190 = vmatpush.bf16.msra.mxu0 %v173
    %191 = vmatpush.bf16.msra.mxu0 %v172
    %192 = vmatpush.bf16.msra.mxu0 %v171
    %193 = vmatpush.bf16.msra.mxu0 %v170
    %194 = vmatmul.bf16.gmra.mxu0 %v120
    %v195 = vpop.f32.mrf.mxu0
    %v196 = vadd.f32 %v137, %v195
    %v197 = vpop.f32.mrf.mxu0
    %198 = vdwg.mxu0
    %v199 = vld [vmem:[#allocation2 + $0x80] sm:$0xf]
    %v200 = vld [vmem:[#allocation2 + $0x84] sm:$0xf]
    %v201 = vld [vmem:[#allocation2 + $0x88] sm:$0xf]
    %v202 = vld [vmem:[#allocation2 + $0x8c] sm:$0xf]
    %v203 = vld [vmem:[#allocation2 + $0x90] sm:$0xf]
    %v204 = vld [vmem:[#allocation2 + $0x94] sm:$0xf]
    %v205 = vld [vmem:[#allocation2 + $0x98] sm:$0xf]
    %v206 = vld [vmem:[#allocation2 + $0x9c] sm:$0xf]
    %v207 = vld [vmem:[#allocation2 + $0xa0] sm:$0xf]
    %v208 = vld [vmem:[#allocation2 + $0xa4] sm:$0xf]
    %v209 = vld [vmem:[#allocation2 + $0xa8] sm:$0xf]
    %v210 = vld [vmem:[#allocation2 + $0xac] sm:$0xf]
    %v211 = vld [vmem:[#allocation2 + $0xb0] sm:$0xf]
    %v212 = vld [vmem:[#allocation2 + $0xb4] sm:$0xf]
    %v213 = vld [vmem:[#allocation2 + $0xb8] sm:$0xf]
    %v214 = vld [vmem:[#allocation2 + $0xbc] sm:$0xf]
    %v215 = vperm.slane %v33, 2
    %v232 = vunpack.c.l.b16 %v199
    %v233 = vunpack.c.l.b16 %v200
    %v234 = vunpack.c.l.b16 %v201
    %v235 = vunpack.c.l.b16 %v202
    %v236 = vunpack.c.l.b16 %v203
    %v237 = vunpack.c.l.b16 %v204
    %v238 = vunpack.c.l.b16 %v205
    %v239 = vunpack.c.l.b16 %v206
    %v240 = vunpack.c.l.b16 %v207
    %v241 = vunpack.c.l.b16 %v208
    %v242 = vunpack.c.l.b16 %v209
    %v243 = vunpack.c.l.b16 %v210
    %v244 = vunpack.c.l.b16 %v211
    %v245 = vunpack.c.l.b16 %v212
    %v246 = vunpack.c.l.b16 %v213
    %v247 = vunpack.c.l.b16 %v214
    %v248 = vpack.c.b16 %v233, %v232
    %v249 = vpack.c.b16 %v235, %v234
    %v250 = vpack.c.b16 %v237, %v236
    %v251 = vpack.c.b16 %v239, %v238
    %v252 = vpack.c.b16 %v241, %v240
    %v253 = vpack.c.b16 %v243, %v242
    %v254 = vpack.c.b16 %v245, %v244
    %v255 = vpack.c.b16 %v247, %v246
    %264 = vmatpush.bf16.msra.mxu0 %v255
    %265 = vmatpush.bf16.msra.mxu0 %v254
    %266 = vmatpush.bf16.msra.mxu0 %v253
    %267 = vmatpush.bf16.msra.mxu0 %v252
    %268 = vmatpush.bf16.msra.mxu0 %v251
    %269 = vmatpush.bf16.msra.mxu0 %v250
    %270 = vmatpush.bf16.msra.mxu0 %v249
    %271 = vmatpush.bf16.msra.mxu0 %v248
    %272 = vmatmul.bf16.gmra.mxu0 %v120
    %v273 = vpop.f32.mrf.mxu0
    %v274 = vadd.f32 %v215, %v273
    %v275 = vpop.f32.mrf.mxu0
    %276 = vdwg.mxu0
    %v277 = vmul.f32 %v274, 1.442695
    %v278 = vpow.pop %v277
    %v279 = vadd.f32 %v278, 0.0001
    %v280 = vrsqrt.pop %v279
    %v281 = vmul.f32 %v280, %v279
    %v282 = vmul.f32 %v281, %v280
    %v283 = vmul.f32 0.5, %v282
    %v284 = vsub.f32 1.5, %v283
    %v285 = vmul.f32 %v280, %v284
    %v286 = vmul.f32 %v279, %v285
    %vm287 = vcmp.eq.f32.partialorder %v279, inf
    %v288 = vsel %vm287, %v279, %v286
    %vm289 = vcmp.eq.f32.partialorder %v279, 0.0
    %v290 = vand.u32 %v279, 2147483648
    %v291 = vsel %vm289, %v290, %v288
    %v292 = vmul.f32 %v291, %v31
    %v293 = vadd.f32 %v196, %v292
    %vm294 = vcmp.lt.s32.totalorder %v36, 8
    %v295 = vsel %vm294, %v293, -1e+30
    %296 = vmax.xlane.f32.xlu0 %v295
    %v297 = vpop.xlane.xlu0 %296
    %v298 = vsub.f32 %v295, %v297
    %v299 = vmul.f32 %v298, 1.442695
    %v300 = vpow.pop %v299
    %301 = vadd.xlane.f32.xlu0 %v300
    %v302 = vpop.xlane.xlu0 %301
    %v303 = vrcp.pop %v302
    %v304 = vmul.f32 %v302, %v303
    %v305 = vsub.f32 1.0, %v304
    %v306 = vmul.f32 %v303, %v305
    %v307 = vadd.f32 %v303, %v306
    %vm308 = vweird.f32 %v302
    %vm309 = vweird.f32 %v303
    %vm310 = vmor %vm308, %vm309
    %v311 = vsel %vm310, %v303, %v307
    %v312 = vand.u32 2147483647, %v302
    %vm313 = vcmp.eq.f32.partialorder %v312, 8.507059e+37
    %v314 = vand.u32 %v302, 2147483648
    %v315 = vor.u32 1.1754944e-38, %v314
    %v316 = vsel %vm313, %v315, %v311
    %v317 = vmul.f32 %v300, %v316
    %v318 = vpack.c.bf16 %v317, %v317
    %v319 = vld [vmem:[#allocation2 + $0xc0] sm:$0xf]
    %v320 = vld [vmem:[#allocation2 + $0xc4] sm:$0xf]
    %v321 = vld [vmem:[#allocation2 + $0xc8] sm:$0xf]
    %v322 = vld [vmem:[#allocation2 + $0xcc] sm:$0xf]
    %v323 = vld [vmem:[#allocation2 + $0xd0] sm:$0xf]
    %v324 = vld [vmem:[#allocation2 + $0xd4] sm:$0xf]
    %v325 = vld [vmem:[#allocation2 + $0xd8] sm:$0xf]
    %v326 = vld [vmem:[#allocation2 + $0xdc] sm:$0xf]
    %v327 = vld [vmem:[#allocation2 + $0xe0] sm:$0xf]
    %v328 = vld [vmem:[#allocation2 + $0xe4] sm:$0xf]
    %v329 = vld [vmem:[#allocation2 + $0xe8] sm:$0xf]
    %v330 = vld [vmem:[#allocation2 + $0xec] sm:$0xf]
    %v331 = vld [vmem:[#allocation2 + $0xf0] sm:$0xf]
    %v332 = vld [vmem:[#allocation2 + $0xf4] sm:$0xf]
    %v333 = vld [vmem:[#allocation2 + $0xf8] sm:$0xf]
    %v334 = vld [vmem:[#allocation2 + $0xfc] sm:$0xf]
    %v335 = vperm.slane %v33, 3
    %v352 = vunpack.c.l.b16 %v319
    %v353 = vunpack.c.l.b16 %v320
    %v354 = vunpack.c.l.b16 %v321
    %v355 = vunpack.c.l.b16 %v322
    %v356 = vunpack.c.l.b16 %v323
    %v357 = vunpack.c.l.b16 %v324
    %v358 = vunpack.c.l.b16 %v325
    %v359 = vunpack.c.l.b16 %v326
    %v360 = vunpack.c.l.b16 %v327
    %v361 = vunpack.c.l.b16 %v328
    %v362 = vunpack.c.l.b16 %v329
    %v363 = vunpack.c.l.b16 %v330
    %v364 = vunpack.c.l.b16 %v331
    %v365 = vunpack.c.l.b16 %v332
    %v366 = vunpack.c.l.b16 %v333
    %v367 = vunpack.c.l.b16 %v334
    %v368 = vpack.c.b16 %v353, %v352
    %v369 = vpack.c.b16 %v355, %v354
    %v370 = vpack.c.b16 %v357, %v356
    %v371 = vpack.c.b16 %v359, %v358
    %v372 = vpack.c.b16 %v361, %v360
    %v373 = vpack.c.b16 %v363, %v362
    %v374 = vpack.c.b16 %v365, %v364
    %v375 = vpack.c.b16 %v367, %v366
    %384 = vmatpush.bf16.msra.mxu0 %v375
    %385 = vmatpush.bf16.msra.mxu0 %v374
    %386 = vmatpush.bf16.msra.mxu0 %v373
    %387 = vmatpush.bf16.msra.mxu0 %v372
    %388 = vmatpush.bf16.msra.mxu0 %v371
    %389 = vmatpush.bf16.msra.mxu0 %v370
    %390 = vmatpush.bf16.msra.mxu0 %v369
    %391 = vmatpush.bf16.msra.mxu0 %v368
    %392 = vmatmul.bf16.gmra.mxu0 %v318
    %v393 = vpop.f32.mrf.mxu0
    %v394 = vadd.f32 %v335, %v393
    %v395 = vpop.f32.mrf.mxu0
    %396 = vdwg.mxu0
    %v397 = vmax.f32 %v394, 0.0
    %v398 = vpack.c.bf16 %v397, %v397
    %v399 = vld [vmem:[#allocation2 + $0x100] sm:$0xf]
    %v400 = vld [vmem:[#allocation2 + $0x104] sm:$0xf]
    %v401 = vld [vmem:[#allocation2 + $0x108] sm:$0xf]
    %v402 = vld [vmem:[#allocation2 + $0x10c] sm:$0xf]
    %v403 = vld [vmem:[#allocation2 + $0x110] sm:$0xf]
    %v404 = vld [vmem:[#allocation2 + $0x114] sm:$0xf]
    %v405 = vld [vmem:[#allocation2 + $0x118] sm:$0xf]
    %v406 = vld [vmem:[#allocation2 + $0x11c] sm:$0xf]
    %v407 = vld [vmem:[#allocation2 + $0x120] sm:$0xf]
    %v408 = vld [vmem:[#allocation2 + $0x124] sm:$0xf]
    %v409 = vld [vmem:[#allocation2 + $0x128] sm:$0xf]
    %v410 = vld [vmem:[#allocation2 + $0x12c] sm:$0xf]
    %v411 = vld [vmem:[#allocation2 + $0x130] sm:$0xf]
    %v412 = vld [vmem:[#allocation2 + $0x134] sm:$0xf]
    %v413 = vld [vmem:[#allocation2 + $0x138] sm:$0xf]
    %v414 = vld [vmem:[#allocation2 + $0x13c] sm:$0xf]
    %v415 = vld [vmem:[#allocation2 + $0x140] sm:$0xf]
    %v416 = vld [vmem:[#allocation2 + $0x144] sm:$0xf]
    %v417 = vld [vmem:[#allocation2 + $0x148] sm:$0xf]
    %v418 = vld [vmem:[#allocation2 + $0x14c] sm:$0xf]
    %v419 = vld [vmem:[#allocation2 + $0x150] sm:$0xf]
    %v420 = vld [vmem:[#allocation2 + $0x154] sm:$0xf]
    %v421 = vld [vmem:[#allocation2 + $0x158] sm:$0xf]
    %v422 = vld [vmem:[#allocation2 + $0x15c] sm:$0xf]
    %v423 = vld [vmem:[#allocation2 + $0x160] sm:$0xf]
    %v424 = vld [vmem:[#allocation2 + $0x164] sm:$0xf]
    %v425 = vld [vmem:[#allocation2 + $0x168] sm:$0xf]
    %v426 = vld [vmem:[#allocation2 + $0x16c] sm:$0xf]
    %v427 = vld [vmem:[#allocation2 + $0x170] sm:$0xf]
    %v428 = vld [vmem:[#allocation2 + $0x174] sm:$0xf]
    %v429 = vld [vmem:[#allocation2 + $0x178] sm:$0xf]
    %v430 = vld [vmem:[#allocation2 + $0x17c] sm:$0xf]
    %v447 = vunpack.c.l.b16 %v415
    %v448 = vunpack.c.l.b16 %v416
    %v449 = vunpack.c.l.b16 %v417
    %v450 = vunpack.c.l.b16 %v418
    %v451 = vunpack.c.l.b16 %v419
    %v452 = vunpack.c.l.b16 %v420
    %v453 = vunpack.c.l.b16 %v421
    %v454 = vunpack.c.l.b16 %v422
    %v455 = vunpack.c.l.b16 %v423
    %v456 = vunpack.c.l.b16 %v424
    %v457 = vunpack.c.l.b16 %v425
    %v458 = vunpack.c.l.b16 %v426
    %v459 = vunpack.c.l.b16 %v427
    %v460 = vunpack.c.l.b16 %v428
    %v461 = vunpack.c.l.b16 %v429
    %v462 = vunpack.c.l.b16 %v430
    %v463 = vpack.c.b16 %v448, %v447
    %v464 = vpack.c.b16 %v450, %v449
    %v465 = vpack.c.b16 %v452, %v451
    %v466 = vpack.c.b16 %v454, %v453
    %v467 = vpack.c.b16 %v456, %v455
    %v468 = vpack.c.b16 %v458, %v457
    %v469 = vpack.c.b16 %v460, %v459
    %v470 = vpack.c.b16 %v462, %v461
    %479 = vmatpush.bf16.msra.mxu0 %v470
    %480 = vmatpush.bf16.msra.mxu0 %v469
    %481 = vmatpush.bf16.msra.mxu0 %v468
    %482 = vmatpush.bf16.msra.mxu0 %v467
    %483 = vmatpush.bf16.msra.mxu0 %v466
    %484 = vmatpush.bf16.msra.mxu0 %v465
    %485 = vmatpush.bf16.msra.mxu0 %v464
    %486 = vmatpush.bf16.msra.mxu0 %v463
    %487 = vmatmul.bf16.gmra.mxu0 %v318
    %v488 = vpop.f32.mrf.mxu0
    %v489 = vadd.f32 0.0, %v488
    %v490 = vpop.f32.mrf.mxu0
    %491 = vdwg.mxu0
    %v508 = vunpack.c.l.b16 %v399
    %v509 = vunpack.c.l.b16 %v400
    %v510 = vunpack.c.l.b16 %v401
    %v511 = vunpack.c.l.b16 %v402
    %v512 = vunpack.c.l.b16 %v403
    %v513 = vunpack.c.l.b16 %v404
    %v514 = vunpack.c.l.b16 %v405
    %v515 = vunpack.c.l.b16 %v406
    %v516 = vunpack.c.l.b16 %v407
    %v517 = vunpack.c.l.b16 %v408
    %v518 = vunpack.c.l.b16 %v409
    %v519 = vunpack.c.l.b16 %v410
    %v520 = vunpack.c.l.b16 %v411
    %v521 = vunpack.c.l.b16 %v412
    %v522 = vunpack.c.l.b16 %v413
    %v523 = vunpack.c.l.b16 %v414
    %v524 = vpack.c.b16 %v509, %v508
    %v525 = vpack.c.b16 %v511, %v510
    %v526 = vpack.c.b16 %v513, %v512
    %v527 = vpack.c.b16 %v515, %v514
    %v528 = vpack.c.b16 %v517, %v516
    %v529 = vpack.c.b16 %v519, %v518
    %v530 = vpack.c.b16 %v521, %v520
    %v531 = vpack.c.b16 %v523, %v522
    %540 = vmatpush.bf16.msra.mxu0 %v531
    %541 = vmatpush.bf16.msra.mxu0 %v530
    %542 = vmatpush.bf16.msra.mxu0 %v529
    %543 = vmatpush.bf16.msra.mxu0 %v528
    %544 = vmatpush.bf16.msra.mxu0 %v527
    %545 = vmatpush.bf16.msra.mxu0 %v526
    %546 = vmatpush.bf16.msra.mxu0 %v525
    %547 = vmatpush.bf16.msra.mxu0 %v524
    %548 = vmatmul.bf16.gmra.mxu0 %v398
    %v549 = vpop.f32.mrf.mxu0
    %v550 = vadd.f32 %v489, %v549
    %v551 = vpop.f32.mrf.mxu0
    %552 = vdwg.mxu0
    %v553 = vperm.slane %v33, 4
    %v554 = vadd.f32 %v550, %v553
    %v555 = vmax.f32 %v554, 0.0
    %v556 = vpack.c.bf16 %v555, %v555
    %v557 = vld [vmem:[#allocation2 + $0x180] sm:$0xf]
    %v558 = vld [vmem:[#allocation2 + $0x184] sm:$0xf]
    %v559 = vld [vmem:[#allocation2 + $0x188] sm:$0xf]
    %v560 = vld [vmem:[#allocation2 + $0x18c] sm:$0xf]
    %v561 = vld [vmem:[#allocation2 + $0x190] sm:$0xf]
    %v562 = vld [vmem:[#allocation2 + $0x194] sm:$0xf]
    %v563 = vld [vmem:[#allocation2 + $0x198] sm:$0xf]
    %v564 = vld [vmem:[#allocation2 + $0x19c] sm:$0xf]
    %v565 = vld [vmem:[#allocation2 + $0x1a0] sm:$0xf]
    %v566 = vld [vmem:[#allocation2 + $0x1a4] sm:$0xf]
    %v567 = vld [vmem:[#allocation2 + $0x1a8] sm:$0xf]
    %v568 = vld [vmem:[#allocation2 + $0x1ac] sm:$0xf]
    %v569 = vld [vmem:[#allocation2 + $0x1b0] sm:$0xf]
    %v570 = vld [vmem:[#allocation2 + $0x1b4] sm:$0xf]
    %v571 = vld [vmem:[#allocation2 + $0x1b8] sm:$0xf]
    %v572 = vld [vmem:[#allocation2 + $0x1bc] sm:$0xf]
    %v573 = vperm.slane %v33, 5
    %v590 = vunpack.c.l.b16 %v557
    %v591 = vunpack.c.l.b16 %v558
    %v592 = vunpack.c.l.b16 %v559
    %v593 = vunpack.c.l.b16 %v560
    %v594 = vunpack.c.l.b16 %v561
    %v595 = vunpack.c.l.b16 %v562
    %v596 = vunpack.c.l.b16 %v563
    %v597 = vunpack.c.l.b16 %v564
    %v598 = vunpack.c.l.b16 %v565
    %v599 = vunpack.c.l.b16 %v566
    %v600 = vunpack.c.l.b16 %v567
    %v601 = vunpack.c.l.b16 %v568
    %v602 = vunpack.c.l.b16 %v569
    %v603 = vunpack.c.l.b16 %v570
    %v604 = vunpack.c.l.b16 %v571
    %v605 = vunpack.c.l.b16 %v572
    %v606 = vpack.c.b16 %v591, %v590
    %v607 = vpack.c.b16 %v593, %v592
    %v608 = vpack.c.b16 %v595, %v594
    %v609 = vpack.c.b16 %v597, %v596
    %v610 = vpack.c.b16 %v599, %v598
    %v611 = vpack.c.b16 %v601, %v600
    %v612 = vpack.c.b16 %v603, %v602
    %v613 = vpack.c.b16 %v605, %v604
    %622 = vmatpush.bf16.msra.mxu0 %v613
    %623 = vmatpush.bf16.msra.mxu0 %v612
    %624 = vmatpush.bf16.msra.mxu0 %v611
    %625 = vmatpush.bf16.msra.mxu0 %v610
    %626 = vmatpush.bf16.msra.mxu0 %v609
    %627 = vmatpush.bf16.msra.mxu0 %v608
    %628 = vmatpush.bf16.msra.mxu0 %v607
    %629 = vmatpush.bf16.msra.mxu0 %v606
    %630 = vmatmul.bf16.gmra.mxu0 %v556
    %v631 = vpop.f32.mrf.mxu0
    %v632 = vadd.f32 %v573, %v631
    %v633 = vpop.f32.mrf.mxu0
    %634 = vdwg.mxu0
    %v635 = vmul.f32 %v632, 1.442695
    %v636 = vpow.pop %v635
    %638 = vrot.lane.b32.xlu0 %v32, 16
    %v639 = vpop.permute.xlu0 %638
    %v641 = vmul.f32 %v636, %v639
    %643 = vrot.lane.b32.xlu0 %v641, 112
    %v644 = vpop.permute.xlu0 %643
    %v646 = vadd.f32 %v632, %v644
    %v647 = vmul.f32 %v646, 1.442695
    %v648 = vpow.pop %v647
    %v649 = vmax.f32 %v632, 0.0
    %v650 = vadd.f32 %v649, 1.0
    %v651 = vadd.f32 %v650, 1e-08
    %653 = vrot.lane.b32.xlu0 %v651, 96
    %v654 = vpop.permute.xlu0 %653
    %v656 = vmul.f32 %v648, %v654
    %v657 = vperm.slane %v33, 6
    %v658 = vadd.f32 %v657, %v648
    %v659 = vadd.f32 %v658, 1e-08
    %v660 = vlog2.pop %v659
    %v661 = vmul.f32 %v660, 0.6931472
    %v662 = vadd.f32 %v657, %v656
    %v663 = vadd.f32 %v662, 1e-08
    %v664 = vlog2.pop %v663
    %v665 = vmul.f32 %v664, 0.6931472
    %v666 = vadd.f32 %v30, %v657
    %v667 = vadd.f32 %v666, 2.0
    %v668 = vrcp.pop %v667
    %v669 = vmul.f32 %v668, %v668
    %v670 = vmul.f32 %v669, 0.0027777778
    %v671 = vsub.f32 0.083333336, %v670
    %v672 = vmul.f32 %v668, %v671
    %v673 = vsub.f32 %v667, 0.5
    %v674 = vlog2.pop %v667
    %v675 = vmul.f32 %v674, 0.6931472
    %v676 = vmul.f32 %v673, %v675
    %v677 = vsub.f32 %v676, %v667
    %v678 = vadd.f32 %v677, 0.9189385
    %v679 = vadd.f32 %v678, %v672
    %v680 = vadd.f32 %v666, 1.0
    %v681 = vmul.f32 %v666, %v680
    %v682 = vlog2.pop %v681
    %v683 = vmul.f32 %v682, 0.6931472
    %v684 = vsub.f32 %v679, %v683
    %v685 = vperm.slane %v34, 0
    %v686 = vsub.f32 %v684, %v685
    %v687 = vadd.f32 %v37, 2.0
    %v688 = vrcp.pop %v687
    %v689 = vmul.f32 %v688, %v688
    %v690 = vmul.f32 %v689, 0.0027777778
    %v691 = vsub.f32 0.083333336, %v690
    %v692 = vmul.f32 %v688, %v691
    %v693 = vsub.f32 %v687, 0.5
    %v694 = vlog2.pop %v687
    %v695 = vmul.f32 %v694, 0.6931472
    %v696 = vmul.f32 %v693, %v695
    %v697 = vsub.f32 %v696, %v687
    %v698 = vadd.f32 %v697, 0.9189385
    %v699 = vadd.f32 %v698, %v692
    %v700 = vadd.f32 %v37, 1.0
    %v701 = vmul.f32 %v37, %v700
    %v702 = vlog2.pop %v701
    %v703 = vmul.f32 %v702, 0.6931472
    %v704 = vsub.f32 %v699, %v703
    %v705 = vsub.f32 %v686, %v704
    %v706 = vperm.slane %v33, 7
    %v707 = vsub.f32 %v706, %v661
    %v708 = vmul.f32 %v657, %v707
    %v709 = vadd.f32 %v648, 1e-08
    %v710 = vlog2.pop %v709
    %v711 = vmul.f32 %v710, 0.6931472
    %v712 = vsub.f32 %v711, %v661
    %v713 = vmul.f32 %v30, %v712
    %v714 = vadd.f32 %v708, %v713
    %v715 = vadd.f32 %v714, %v705
    %v716 = vsub.f32 %v706, %v665
    %v717 = vmul.f32 %v657, %v716
    %v718 = vadd.f32 %v656, 1e-08
    %v719 = vlog2.pop %v718
    %v720 = vmul.f32 %v719, 0.6931472
    %v721 = vsub.f32 %v720, %v665
    %v722 = vmul.f32 %v30, %v721
    %v723 = vadd.f32 %v717, %v722
    %v724 = vadd.f32 %v723, %v705
    %726 = vrot.lane.b32.xlu0 %v632, 80
    %v727 = vpop.permute.xlu0 %726
    %v729 = vsub.f32 %v724, %v727
    %v730 = vmax.f32 %v715, %v729
    %v731 = vsub.f32 %v715, %v729
    %v732 = vand.u32 2147483647, %v731
    %v733 = vsub.f32 0.0, %v732
    %v734 = vmul.f32 %v733, 1.442695
    %v735 = vpow.pop %v734
    %v736 = vadd.f32 %v735, 1.0
    %v737 = vlog2.pop %v736
    %v738 = vmul.f32 %v737, 0.6931472
    %v739 = vadd.f32 %v730, %v738
    %v740 = vsub.f32 0.0, %v632
    %v741 = vmax.f32 %v740, 0.0
    %v742 = vand.u32 2147483647, %v632
    %v743 = vsub.f32 0.0, %v742
    %v744 = vmul.f32 %v743, 1.442695
    %v745 = vpow.pop %v744
    %v746 = vadd.f32 %v745, 1.0
    %v747 = vlog2.pop %v746
    %v748 = vmul.f32 %v747, 0.6931472
    %v749 = vadd.f32 %v741, %v748
    %751 = vrot.lane.b32.xlu0 %v739, 48
    %v752 = vpop.permute.xlu0 %751
    %v754 = vsub.f32 %v749, %v752
    %756 = vrot.lane.b32.xlu0 %v754, 80
    %v757 = vpop.permute.xlu0 %756
    %vm759 = vcmask 130048
    %v760 = vsel %vm759, %v757, 0.0
    %761 = vadd.xlane.f32.xlu0 %v760
    %v762 = vpop.xlane.xlu0 %761
    %v763 = vmul.f32 %v196, %v196
    %v764 = vadd.f32 %v279, %v763
    %v765 = vsub.f32 %v764, 1.0
    %v766 = vlog2.pop %v279
    %v767 = vmul.f32 %v766, 0.6931472
    %v768 = vsub.f32 %v765, %v767
    %v769 = vmul.f32 %v768, 0.5
    %vm770 = vcmask 64512
    %v771 = vsel %vm770, %v769, 0.0
    %772 = vadd.xlane.f32.xlu0 %v771
    %v773 = vpop.xlane.xlu0 %772
    %v774 = vperm.slane %v34, 2
    %776 = vrot.lane.b32.xlu0 %v774, 16
    %v777 = vpop.permute.xlu0 %776
    %v779 = vmul.f32 %v636, %v777
    %v780 = vperm.slane %v34, 1
    %v781 = vsub.f32 %v632, %v780
    %v782 = vmul.f32 %v781, %v774
    %v783 = vmul.f32 %v779, %v779
    %v784 = vmul.f32 %v782, %v782
    %786 = vrot.lane.b32.xlu0 %v784, 16
    %v787 = vpop.permute.xlu0 %786
    %v789 = vadd.f32 %v783, %v787
    %v790 = vsub.f32 %v789, 1.0
    %v791 = vmul.f32 %v790, 0.5
    %v792 = vperm.slane %v34, 3
    %794 = vrot.lane.b32.xlu0 %v792, 16
    %v795 = vpop.permute.xlu0 %794
    %v797 = vsub.f32 %v632, %v795
    %v798 = vsub.f32 %v791, %v797
    %800 = vrot.lane.b32.xlu0 %v798, 112
    %v801 = vpop.permute.xlu0 %800
    %v803 = vsel %vm759, %v801, 0.0
    %804 = vadd.xlane.f32.xlu0 %v803
    %v805 = vpop.xlane.xlu0 %804
    %vm806 = vcmp.eq.s32.totalorder %v36, 8
    %v807 = vsel %vm806, %v762, 0.0
    %v808 = vadd.f32 %v317, %v807
    %vm809 = vcmp.eq.s32.totalorder %v36, 9
    %v810 = vsel %vm809, %v773, 0.0
    %v811 = vadd.f32 %v808, %v810
    %vm812 = vcmp.eq.s32.totalorder %v36, 10
    %v813 = vsel %vm812, %v805, 0.0
    %v814 = vadd.f32 %v811, %v813
    %815 = vst [vmem:[%s3] sm:$0xff] %v814
    // Predicated region
    $region18: #{proteinvi_forward.1} parent=1 // pred_check
      _
    $region19: #{proteinvi_forward.1} parent=1 // pred_check_branch
      %817 = sbr.rel (0) target = $region21
    $region20: #{proteinvi_forward.1} parent=1 // pred_region
      _
    $region21: #{proteinvi_forward.1} parent=1 // pred_fallthru
      _
    // Predicated region
    $region22: #{proteinvi_forward.1} parent=1 // pred_check
      _
    $region23: #{proteinvi_forward.1} parent=1 // pred_check_branch
      %819 = sbr.rel (0) target = $region25
    $region24: #{proteinvi_forward.1} parent=1 // pred_region
      _
    $region25: #{proteinvi_forward.1} parent=1 // pred_fallthru
      _
    %820 = vsyncpa [#allocation3], 1

</llo_original>
